<compile_context>
chip_gen: v5e
topology: v5e:2x2
jax: 0.10.0
libtpu: 0.0.40
codegen_flags: <defaults>
</compile_context>

<pallas_src>
import jax
import jax.numpy as jnp
from jax.experimental import pallas as pl
from jax.experimental.pallas import tpu as pltpu

STATE_DIM = 6
HIDDEN = 100
ACTION_N = 3

# Padded sizes for clean sublane/lane tiles (8, 128).
STATE_DIM_PAD = 8      # 6  -> 8   (sublane-clean K for the first matmul)
HIDDEN_PAD = 128       # 100 -> 128 (lane-clean N / K for the two matmuls)

DEFAULT_BATCH_TILE = 1024   # rows per grid step (lane-padded footprint ~ a few MiB dbl-buffered)


def _round_up(n: int, m: int) -> int:
    return (n + m - 1) // m * m


def cem_forward_kernel(x_ref, w1_ref, b1_ref, w2_ref, b2_ref, o_ref):
    # x:  (TB, STATE_DIM_PAD)        bf16
    # w1: (STATE_DIM_PAD, HIDDEN_PAD) bf16   b1: (1, HIDDEN_PAD) f32
    # w2: (HIDDEN_PAD, ACTION_N)      bf16   b2: (1, ACTION_N)   f32
    # o:  (TB, ACTION_N)              f32
    h = jnp.dot(x_ref[...], w1_ref[...],
                preferred_element_type=jnp.float32) + b1_ref[...]
    h = jnp.maximum(h, 0.0)                                   # ReLU in f32 on the VPU
    logits = jnp.dot(h.astype(jnp.bfloat16), w2_ref[...],
                     preferred_element_type=jnp.float32) + b2_ref[...]
    o_ref[...] = logits.astype(o_ref.dtype)


def cem_forward(x, w1, b1, w2, b2, *, batch_tile=DEFAULT_BATCH_TILE):
    """x: (B, STATE_DIM) f32, w1: (STATE_DIM, HIDDEN), b1: (HIDDEN,),
    w2: (HIDDEN, ACTION_N), b2: (ACTION_N,)  ->  logits (B, ACTION_N) f32."""
    B = x.shape[0]
    tb = min(batch_tile, _round_up(B, 8))       # tile is a multiple of 8 sublanes
    b_pad = _round_up(B, tb)

    # Zero-pad + cast streaming operands to bf16 (padding rows/cols contribute 0).
    xp = (jnp.zeros((b_pad, STATE_DIM_PAD), jnp.bfloat16)
             .at[:B, :STATE_DIM].set(x.astype(jnp.bfloat16)))
    w1p = (jnp.zeros((STATE_DIM_PAD, HIDDEN_PAD), jnp.bfloat16)
              .at[:STATE_DIM, :HIDDEN].set(w1.astype(jnp.bfloat16)))
    b1p = (jnp.zeros((1, HIDDEN_PAD), jnp.float32)
              .at[:, :HIDDEN].set(b1.reshape(1, HIDDEN).astype(jnp.float32)))
    w2p = (jnp.zeros((HIDDEN_PAD, ACTION_N), jnp.bfloat16)
              .at[:HIDDEN, :].set(w2.astype(jnp.bfloat16)))
    b2p = b2.reshape(1, ACTION_N).astype(jnp.float32)

    grid = (b_pad // tb,)
    out = pl.pallas_call(
        cem_forward_kernel,
        out_shape=jax.ShapeDtypeStruct((b_pad, ACTION_N), jnp.float32),
        grid=grid,
        in_specs=[
            pl.BlockSpec((tb, STATE_DIM_PAD), lambda i: (i, 0)),          # x: tiled over batch
            pl.BlockSpec((STATE_DIM_PAD, HIDDEN_PAD), lambda i: (0, 0)),  # w1: pinned
            pl.BlockSpec((1, HIDDEN_PAD), lambda i: (0, 0)),              # b1: pinned
            pl.BlockSpec((HIDDEN_PAD, ACTION_N), lambda i: (0, 0)),       # w2: pinned
            pl.BlockSpec((1, ACTION_N), lambda i: (0, 0)),                # b2: pinned
        ],
        out_specs=pl.BlockSpec((tb, ACTION_N), lambda i: (i, 0)),
        compiler_params=pltpu.CompilerParams(
            dimension_semantics=("parallel",)),   # megacore sharding on v7x
    )(xp, w1p, b1p, w2p, b2p)
    return out[:B]


def cem_forward_ref(x, w1, b1, w2, b2):
    """Plain-JAX reference matching the kernel's bf16 streaming / f32 accumulate path."""
    xb = x.astype(jnp.bfloat16).astype(jnp.float32)
    w1b = w1.astype(jnp.bfloat16).astype(jnp.float32)
    w2b = w2.astype(jnp.bfloat16).astype(jnp.float32)
    h = jnp.maximum(xb @ w1b + b1.reshape(1, -1), 0.0)
    hb = h.astype(jnp.bfloat16).astype(jnp.float32)
    return hb @ w2b + b2.reshape(1, -1)


def init_params(key):
    """Deterministic init mimicking PyTorch nn.Linear default (uniform +-1/sqrt(fan_in)).
    Weights stored as (in, out) so the kernel computes x @ W (PyTorch does x @ W.T)."""
    k1, k2, k3, k4 = jax.random.split(key, 4)
    bound1 = 1.0 / jnp.sqrt(STATE_DIM)
    bound2 = 1.0 / jnp.sqrt(HIDDEN)
    w1 = jax.random.uniform(k1, (STATE_DIM, HIDDEN), jnp.float32, -bound1, bound1)
    b1 = jax.random.uniform(k2, (HIDDEN,), jnp.float32, -bound1, bound1)
    w2 = jax.random.uniform(k3, (HIDDEN, ACTION_N), jnp.float32, -bound2, bound2)
    b2 = jax.random.uniform(k4, (ACTION_N,), jnp.float32, -bound2, bound2)
    return w1, b1, w2, b2


if __name__ == "__main__":
    key = jax.random.PRNGKey(0)
    pkey, xkey1, xkey2 = jax.random.split(key, 3)
    w1, b1, w2, b2 = init_params(pkey)

    # Small case (single policy eval sized batch).
    batch = 8
    x = jax.random.normal(xkey1, (batch, STATE_DIM), jnp.float32)
    logits = jax.block_until_ready(cem_forward(x, w1, b1, w2, b2))
    ref = cem_forward_ref(x, w1, b1, w2, b2)
    assert logits.shape == (batch, ACTION_N)
    assert jnp.allclose(logits, ref, atol=1e-3, rtol=1e-3)

    # Larger, non-tile-multiple batch to exercise the grid + tail padding path.
    batch2 = 300
    x2 = jax.random.normal(xkey2, (batch2, STATE_DIM), jnp.float32)
    logits2 = jax.block_until_ready(cem_forward(x2, w1, b1, w2, b2, batch_tile=128))
    ref2 = cem_forward_ref(x2, w1, b1, w2, b2)
    assert logits2.shape == (batch2, ACTION_N)
    assert jnp.allclose(logits2, ref2, atol=1e-3, rtol=1e-3)

    print("KERNEL_OK")
</pallas_src>

<mosaic_0001>
module attributes {stable_mosaic.version = 11 : i64} {
  func.func @cem_forward_kernel(%arg0: i32, %arg1: memref<8x8xbf16, #tpu.memory_space<vmem>>, %arg2: memref<8x128xbf16, #tpu.memory_space<vmem>>, %arg3: memref<1x128xf32, #tpu.memory_space<vmem>>, %arg4: memref<128x3xbf16, #tpu.memory_space<vmem>>, %arg5: memref<1x3xf32, #tpu.memory_space<vmem>>, %arg6: memref<8x3xf32, #tpu.memory_space<vmem>>) attributes {dimension_semantics = [#tpu.dimension_semantics<parallel>], iteration_bounds = array<i64: 1>, scalar_prefetch = 0 : i64, scratch_operands = 0 : i64, tpu.core_type = #tpu.core_type<tc>, window_params = [{transform_indices = @transform_0, window_bounds = array<i64: 8, 8>}, {pipeline_mode = #tpu.pipeline_mode<synchronous>, transform_indices = @transform_1, window_bounds = array<i64: 8, 128>}, {pipeline_mode = #tpu.pipeline_mode<synchronous>, transform_indices = @transform_2, window_bounds = array<i64: 1, 128>}, {pipeline_mode = #tpu.pipeline_mode<synchronous>, transform_indices = @transform_3, window_bounds = array<i64: 128, 3>}, {pipeline_mode = #tpu.pipeline_mode<synchronous>, transform_indices = @transform_4, window_bounds = array<i64: 1, 3>}, {transform_indices = @transform_5, window_bounds = array<i64: 8, 3>}]} {
    %c0 = arith.constant 0 : index
    %c0_0 = arith.constant 0 : index
    %0 = vector.load %arg1[%c0, %c0_0] : memref<8x8xbf16, #tpu.memory_space<vmem>>, vector<8x8xbf16>
    %c0_1 = arith.constant 0 : index
    %c0_2 = arith.constant 0 : index
    %1 = vector.load %arg2[%c0_1, %c0_2] : memref<8x128xbf16, #tpu.memory_space<vmem>>, vector<8x128xbf16>
    %cst = arith.constant dense<0.000000e+00> : vector<8x128xf32>
    %2 = tpu.matmul %0, %1, %cst {dimension_numbers = #tpu.dot_dimension_numbers<[1], [0], [0], [1], [0, 0, 1, 1], [], []>} : vector<8x8xbf16>, vector<8x128xbf16>, vector<8x128xf32> -> vector<8x128xf32>
    %c0_3 = arith.constant 0 : index
    %c0_4 = arith.constant 0 : index
    %3 = vector.load %arg3[%c0_3, %c0_4] : memref<1x128xf32, #tpu.memory_space<vmem>>, vector<1x128xf32>
    %4 = vector.broadcast %3 : vector<1x128xf32> to vector<8x128xf32>
    %5 = arith.addf %2, %4 : vector<8x128xf32>
    %cst_5 = arith.constant 0.000000e+00 : f32
    %6 = vector.broadcast %cst_5 : f32 to vector<8x128xf32>
    %7 = arith.maximumf %5, %6 : vector<8x128xf32>
    %8 = arith.truncf %7 : vector<8x128xf32> to vector<8x128xbf16>
    %c0_6 = arith.constant 0 : index
    %c0_7 = arith.constant 0 : index
    %9 = vector.load %arg4[%c0_6, %c0_7] : memref<128x3xbf16, #tpu.memory_space<vmem>>, vector<128x3xbf16>
    %cst_8 = arith.constant dense<0.000000e+00> : vector<8x3xf32>
    %10 = tpu.matmul %8, %9, %cst_8 {dimension_numbers = #tpu.dot_dimension_numbers<[1], [0], [0], [1], [0, 0, 1, 1], [], []>} : vector<8x128xbf16>, vector<128x3xbf16>, vector<8x3xf32> -> vector<8x3xf32>
    %c0_9 = arith.constant 0 : index
    %c0_10 = arith.constant 0 : index
    %11 = vector.load %arg5[%c0_9, %c0_10] : memref<1x3xf32, #tpu.memory_space<vmem>>, vector<1x3xf32>
    %12 = vector.broadcast %11 : vector<1x3xf32> to vector<8x3xf32>
    %13 = arith.addf %10, %12 : vector<8x3xf32>
    %c0_11 = arith.constant 0 : index
    %c0_12 = arith.constant 0 : index
    %14 = vector.load %arg6[%c0_11, %c0_12] : memref<8x3xf32, #tpu.memory_space<vmem>>, vector<8x3xf32>
    tpu.vector_store %arg6[%c0_11, %c0_12], %13 {strides = array<i32>} : memref<8x3xf32, #tpu.memory_space<vmem>>, vector<8x3xf32>,
    return
  }
  func.func @transform_0(%arg0: i32) -> (i32, i32) {
    %c0_i32 = arith.constant 0 : i32
    %c0_i32_0 = arith.constant 0 : i32
    return %arg0, %c0_i32 : i32, i32
  }
  func.func @transform_1(%arg0: i32) -> (i32, i32) {
    %c0_i32 = arith.constant 0 : i32
    %c0_i32_0 = arith.constant 0 : i32
    %c0_i32_1 = arith.constant 0 : i32
    return %c0_i32, %c0_i32_0 : i32, i32
  }
  func.func @transform_2(%arg0: i32) -> (i32, i32) {
    %c0_i32 = arith.constant 0 : i32
    %c0_i32_0 = arith.constant 0 : i32
    %c0_i32_1 = arith.constant 0 : i32
    return %c0_i32, %c0_i32_0 : i32, i32
  }
  func.func @transform_3(%arg0: i32) -> (i32, i32) {
    %c0_i32 = arith.constant 0 : i32
    %c0_i32_0 = arith.constant 0 : i32
    %c0_i32_1 = arith.constant 0 : i32
    return %c0_i32, %c0_i32_0 : i32, i32
  }
  func.func @transform_4(%arg0: i32) -> (i32, i32) {
    %c0_i32 = arith.constant 0 : i32
    %c0_i32_0 = arith.constant 0 : i32
    %c0_i32_1 = arith.constant 0 : i32
    return %c0_i32, %c0_i32_0 : i32, i32
  }
  func.func @transform_5(%arg0: i32) -> (i32, i32) {
    %c0_i32 = arith.constant 0 : i32
    %c0_i32_0 = arith.constant 0 : i32
    return %arg0, %c0_i32 : i32, i32
  }
}

</mosaic_0001>

<llo_original>
// kernel: tpu_custom_call.1
$region0: #{tpu_custom_call.1}
  #allocation0 [shape = 'u32[]', space=smem, size = 0x4, offset = 0x4, fixed_abs, tag = 'smem constant byte address 0x4 - core index']
  #allocation1 [shape = 'u32[72,128]{1,0:T(1,128)}', space=vmem, size = 0x9000, scoped, tag = 'internal scratch']
  %s0 = inlined_call_operand.vmem [shape: bf16[8,8], index: 0, kind: input, shape index: {}]
  %s1 = inlined_call_operand.vmem [shape: bf16[8,128], index: 1, kind: input, shape index: {}]
  %s2 = inlined_call_operand.vmem [shape: f32[1,128], index: 2, kind: input, shape index: {}]
  %s3 = inlined_call_operand.vmem [shape: bf16[128,3], index: 3, kind: input, shape index: {}]
  %s4 = inlined_call_operand.vmem [shape: f32[1,3], index: 4, kind: input, shape index: {}]
  %s5 = inlined_call_operand.vmem [shape: f32[8,3], index: 5, kind: output, shape index: {}]
  %s6 = sld [smem:[#allocation0]]
  $region30: #{tpu_custom_call.1} parent=0
    _
  %s8 = ssub.s32 1, %s6
  %s9 = scalar_select 0, %s8, %s6
  // Predicated region
  $region2: #{tpu_custom_call.1} parent=0 // pred_check
    _
  $region3: #{tpu_custom_call.1} parent=0 // pred_check_branch
    %11 = sbr.rel (0) target = $region5
  $region4: #{tpu_custom_call.1} parent=0 // pred_region
    _
  $region5: #{tpu_custom_call.1} parent=0 // pred_fallthru
    _
  // Predicated region
  $region6: #{tpu_custom_call.1} parent=0 // pred_check
    _
  $region7: #{tpu_custom_call.1} parent=0 // pred_check_branch
    %13 = sbr.rel (0) target = $region9
  $region8: #{tpu_custom_call.1} parent=0 // pred_region
    _
  $region9: #{tpu_custom_call.1} parent=0 // pred_fallthru
    _
  // Predicated region
  $region10: #{tpu_custom_call.1} parent=0 // pred_check
    _
  $region11: #{tpu_custom_call.1} parent=0 // pred_check_branch
    %15 = sbr.rel (0) target = $region13
  $region12: #{tpu_custom_call.1} parent=0 // pred_region
    _
  $region13: #{tpu_custom_call.1} parent=0 // pred_fallthru
    _
  // Predicated region
  $region14: #{tpu_custom_call.1} parent=0 // pred_check
    _
  $region15: #{tpu_custom_call.1} parent=0 // pred_check_branch
    %17 = sbr.rel (0) target = $region17
  $region16: #{tpu_custom_call.1} parent=0 // pred_region
    _
  $region17: #{tpu_custom_call.1} parent=0 // pred_fallthru
    _
  // Predicated region
  $region18: #{tpu_custom_call.1} parent=0 // pred_check
    _
  $region19: #{tpu_custom_call.1} parent=0 // pred_check_branch
    %19 = sbr.rel (0) target = $region21
  $region20: #{tpu_custom_call.1} parent=0 // pred_region
    _
  $region21: #{tpu_custom_call.1} parent=0 // pred_fallthru
    _
  %v21 = vld [vmem:[%s0] sm:$0xf]
  %v22 = vld [vmem:[%s1] sm:$0xf]
  %v23 = vld [vmem:[%s2] sm:$0x1]
  %v25 = vperm.slane %v23, 0
  %vm27 = vcmask 64512
  %v29 = vsel %vm27, %v21, 0
  %vm31 = vcmask 1043456
  %v33 = vsel %vm31, %v22, 0
  %35 = vmatpush.bf16.msra.mxu0 0
  %36 = vmatpush.bf16.msra.mxu0 0
  %37 = vmatpush.bf16.msra.mxu0 0
  %38 = vmatpush.bf16.msra.mxu0 0
  %39 = vmatpush.bf16.msra.mxu0 0
  %40 = vmatpush.bf16.msra.mxu0 0
  %41 = vmatpush.bf16.msra.mxu0 0
  %42 = vmatpush.bf16.msra.mxu0 %v33
  %43 = vmatmul.bf16.gmra.mxu0 %v29
  %v44 = vpop.f32.mrf.mxu0
  %v45 = vadd.f32 %v25, %v44
  %v46 = vpop.f32.mrf.mxu0
  %47 = vdwg.mxu0
  %v48 = vmax.f32 %v45, 0.0
  %v49 = vpack.c.bf16 %v48, %v48
  %v50 = vld [vmem:[%s3] sm:$0xf]
  %v51 = vld [vmem:[%s3 + $0x4] sm:$0xf]
  %v52 = vld [vmem:[%s3 + $0x8] sm:$0xf]
  %v53 = vld [vmem:[%s3 + $0xc] sm:$0xf]
  %v54 = vld [vmem:[%s3 + $0x10] sm:$0xf]
  %v55 = vld [vmem:[%s3 + $0x14] sm:$0xf]
  %v56 = vld [vmem:[%s3 + $0x18] sm:$0xf]
  %v57 = vld [vmem:[%s3 + $0x1c] sm:$0xf]
  %v58 = vld [vmem:[%s3 + $0x20] sm:$0xf]
  %v59 = vld [vmem:[%s3 + $0x24] sm:$0xf]
  %v60 = vld [vmem:[%s3 + $0x28] sm:$0xf]
  %v61 = vld [vmem:[%s3 + $0x2c] sm:$0xf]
  %v62 = vld [vmem:[%s3 + $0x30] sm:$0xf]
  %v63 = vld [vmem:[%s3 + $0x34] sm:$0xf]
  %v64 = vld [vmem:[%s3 + $0x38] sm:$0xf]
  %v65 = vld [vmem:[%s3 + $0x3c] sm:$0xf]
  %v66 = vld [vmem:[%s4] sm:$0x1]
  %v68 = vperm.slane %v66, 0
  %v86 = vunpack.c.l.b16 %v50
  %v87 = vunpack.c.l.b16 %v51
  %v88 = vunpack.c.l.b16 %v52
  %v89 = vunpack.c.l.b16 %v53
  %v90 = vunpack.c.l.b16 %v54
  %v91 = vunpack.c.l.b16 %v55
  %v92 = vunpack.c.l.b16 %v56
  %v93 = vunpack.c.l.b16 %v57
  %v94 = vunpack.c.l.b16 %v58
  %v95 = vunpack.c.l.b16 %v59
  %v96 = vunpack.c.l.b16 %v60
  %v97 = vunpack.c.l.b16 %v61
  %v98 = vunpack.c.l.b16 %v62
  %v99 = vunpack.c.l.b16 %v63
  %v100 = vunpack.c.l.b16 %v64
  %v101 = vunpack.c.l.b16 %v65
  %v102 = vpack.c.b16 %v87, %v86
  %v103 = vpack.c.b16 %v89, %v88
  %v104 = vpack.c.b16 %v91, %v90
  %v105 = vpack.c.b16 %v93, %v92
  %v106 = vpack.c.b16 %v95, %v94
  %v107 = vpack.c.b16 %v97, %v96
  %v108 = vpack.c.b16 %v99, %v98
  %v109 = vpack.c.b16 %v101, %v100
  %118 = vmatpush.bf16.msra.mxu0 %v109
  %119 = vmatpush.bf16.msra.mxu0 %v108
  %120 = vmatpush.bf16.msra.mxu0 %v107
  %121 = vmatpush.bf16.msra.mxu0 %v106
  %122 = vmatpush.bf16.msra.mxu0 %v105
  %123 = vmatpush.bf16.msra.mxu0 %v104
  %124 = vmatpush.bf16.msra.mxu0 %v103
  %125 = vmatpush.bf16.msra.mxu0 %v102
  %126 = vmatmul.bf16.gmra.mxu0 %v49
  %v127 = vpop.f32.mrf.mxu0
  %v128 = vadd.f32 %v68, %v127
  %v129 = vpop.f32.mrf.mxu0
  %130 = vdwg.mxu0
  %vm131 = vcmask 23552
  %132 = vst.msk [vmem:[%s5] sm:$0xff] %vm131, %v128
  // Predicated region
  $region22: #{tpu_custom_call.1} parent=0 // pred_check
    _
  $region23: #{tpu_custom_call.1} parent=0 // pred_check_branch
    %134 = sbr.rel (0) target = $region25
  $region24: #{tpu_custom_call.1} parent=0 // pred_region
    _
  $region25: #{tpu_custom_call.1} parent=0 // pred_fallthru
    _
  // Predicated region
  $region26: #{tpu_custom_call.1} parent=0 // pred_check
    _
  $region27: #{tpu_custom_call.1} parent=0 // pred_check_branch
    %136 = sbr.rel (0) target = $region29
  $region28: #{tpu_custom_call.1} parent=0 // pred_region
    _
  $region29: #{tpu_custom_call.1} parent=0 // pred_fallthru
    _

</llo_original>
